<compile_context>
chip_gen: v7x
topology: tpu7x:2x2x1
jax: 0.10.0
libtpu: 0.0.40
codegen_flags: <defaults>
</compile_context>

<pallas_src>
import functools

import numpy as np
import jax
import jax.numpy as jnp
from jax.experimental import pallas as pl
from jax.experimental.pallas import tpu as pltpu


@functools.lru_cache(maxsize=None)
def _vmem_limit():
    """Per-generation scoped-VMEM budget (~3/4 of physical), safe fallback."""
    try:
        cap = getattr(pltpu.get_tpu_info(), "vmem_capacity_bytes", None)
        if cap:
            return max(32 << 20, min(int(cap) * 3 // 4, 112 << 20))
    except Exception:
        pass
    return 48 << 20  # valid on v5e / v6e / v7x


# ---------------------------------------------------------------------------
# Static matrices for adaptive average pooling and bilinear (align_corners)
# ---------------------------------------------------------------------------
def adaptive_pool_matrix(in_size, out_size):
    """P[i, :] averages input indices [floor(i*in/out), ceil((i+1)*in/out))."""
    P = np.zeros((out_size, in_size), np.float32)
    for i in range(out_size):
        start = (i * in_size) // out_size
        end = -(-((i + 1) * in_size) // out_size)  # ceil division
        P[i, start:end] = 1.0 / (end - start)
    return P


def bilinear_matrix(out_size, in_size):
    """A[i, :] implements F.interpolate(..., mode='bilinear', align_corners=True)."""
    A = np.zeros((out_size, in_size), np.float32)
    if in_size == 1:
        A[:, 0] = 1.0
        return A
    for i in range(out_size):
        src = i * (in_size - 1) / (out_size - 1) if out_size > 1 else 0.0
        i0 = min(int(np.floor(src)), in_size - 1)
        i1 = min(i0 + 1, in_size - 1)
        f = src - i0
        A[i, i0] += 1.0 - f
        A[i, i1] += f
    return A


# ---------------------------------------------------------------------------
# Kernel 1: adaptive avg-pool (all bins) + 1x1 conv (folded BN) + ReLU
# ---------------------------------------------------------------------------
def _pool_kernel(x_ref, p_ref, wb_ref, shift_ref, mask_ref, y_ref, acc_ref):
    q = pl.program_id(1)

    @pl.when(q == 0)
    def _():
        acc_ref[...] = jnp.zeros_like(acc_ref)

    # Partial adaptive-average-pool for this HW tile (all bins stacked on rows).
    acc_ref[...] += jnp.dot(p_ref[...], x_ref[...].astype(jnp.float32),
                            preferred_element_type=jnp.float32)        # (BBp, C)

    @pl.when(q == pl.num_programs(1) - 1)
    def _():
        # All-branch 1x1 conv (scale folded) + shift + ReLU, run ONCE per batch.
        # The mask kills cross-branch terms and the BBp padding rows.
        z = jnp.dot(acc_ref[...].astype(jnp.bfloat16), wb_ref[...],
                    preferred_element_type=jnp.float32)                 # (BBp, CB)
        y_ref[...] = (jnp.maximum(z + shift_ref[...], 0.0)
                      * mask_ref[...]).astype(y_ref.dtype)


def ppm_pool_branches(xf, p_all, wb, shift_b, mask, *, tq):
    N, HW, C = xf.shape
    BBp = p_all.shape[0]
    CB = wb.shape[1]
    return pl.pallas_call(
        _pool_kernel,
        out_shape=jax.ShapeDtypeStruct((N, BBp, CB), jnp.float32),
        grid=(N, HW // tq),
        in_specs=[
            pl.BlockSpec((pl.Squeezed(), tq, C), lambda n, q: (n, q, 0)),
            pl.BlockSpec((BBp, tq), lambda n, q: (0, q)),
            pl.BlockSpec((C, CB), lambda n, q: (0, 0)),
            pl.BlockSpec((1, CB), lambda n, q: (0, 0)),
            pl.BlockSpec((BBp, CB), lambda n, q: (0, 0)),
        ],
        out_specs=pl.BlockSpec((pl.Squeezed(), BBp, CB), lambda n, q: (n, 0, 0)),
        scratch_shapes=[pltpu.VMEM((BBp, C), jnp.float32)],
        compiler_params=pltpu.CompilerParams(
            dimension_semantics=("parallel", "arbitrary"),
            vmem_limit_bytes=_vmem_limit()),
    )(xf, p_all, wb, shift_b, mask)


# ---------------------------------------------------------------------------
# Kernel 2: per-row bilinear upsample + concat, written into padded layout
# ---------------------------------------------------------------------------
def _concat_kernel(x_ref, a_ref, y_ref, o_ref, *, h_img, w_img):
    h = pl.program_id(1)
    is_border = (h == 0) | (h == h_img + 1)

    @pl.when(is_border)
    def _():
        o_ref[...] = jnp.zeros_like(o_ref)

    @pl.when(jnp.logical_not(is_border))
    def _():
        # Upsample every branch for this image row: (W, BBp) @ (BBp, CB), f32.
        up = jnp.dot(a_ref[...], y_ref[...], preferred_element_type=jnp.float32)
        # Build the padded row entirely in bf16 (no f32 intermediate, x is a
        # bf16 pass-through) and do one full-tile store.
        row = jnp.concatenate([x_ref[...], up.astype(o_ref.dtype)], axis=-1)
        zrow = jnp.zeros((1, row.shape[1]), o_ref.dtype)
        o_ref[...] = jnp.concatenate([zrow, row, zrow], axis=0)


def ppm_concat_pad(x_nhwc, a_hwp, y):
    N, H, W, C = x_nhwc.shape
    BBp, CB = y.shape[1], y.shape[2]
    Cin = C + CB
    kern = functools.partial(_concat_kernel, h_img=H, w_img=W)

    def clamp_row(h):  # image row for padded row h (borders read a dummy row)
        return jnp.minimum(jnp.maximum(h - 1, 0), H - 1)

    return pl.pallas_call(
        kern,
        out_shape=jax.ShapeDtypeStruct((N, H + 2, W + 2, Cin), jnp.bfloat16),
        grid=(N, H + 2),
        in_specs=[
            pl.BlockSpec((pl.Squeezed(), pl.Squeezed(), W, C),
                         lambda n, h: (n, clamp_row(h), 0, 0)),
            pl.BlockSpec((pl.Squeezed(), W, BBp),
                         lambda n, h: (clamp_row(h), 0, 0)),
            pl.BlockSpec((pl.Squeezed(), BBp, CB), lambda n, h: (n, 0, 0)),
        ],
        out_specs=pl.BlockSpec((pl.Squeezed(), pl.Squeezed(), W + 2, Cin),
                               lambda n, h: (n, h, 0, 0)),
        compiler_params=pltpu.CompilerParams(
            dimension_semantics=("parallel", "parallel"),
            vmem_limit_bytes=_vmem_limit()),
    )(x_nhwc, a_hwp, y)


# ---------------------------------------------------------------------------
# Kernel 3: 3x3 conv + folded BN + ReLU (TH rows per step, weight resident)
# ---------------------------------------------------------------------------
def _merge_kernel(*refs, th, w, cin, split_taps):
    rows = [refs[r][...] for r in range(th + 2)]          # (W+2, Cin) bf16 each
    w3_ref, shift_ref, o_ref = refs[th + 2], refs[th + 3], refs[th + 4]

    if split_taps:
        # Real-size path (Cin >= 1024): nine accumulating big-K matmuls,
        # no materialized (TH*W, 9*Cin) patch.
        acc = None
        for dy in range(3):
            for dx in range(3):
                lhs = jnp.concatenate(
                    [rows[t + dy][dx:dx + w, :] for t in range(th)], axis=0)
                wblk = w3_ref[(dy * 3 + dx) * cin:(dy * 3 + dx + 1) * cin, :]
                d = jnp.dot(lhs, wblk, preferred_element_type=jnp.float32)
                acc = d if acc is None else acc + d
    else:
        # Toy/small-Cin path: fuse the nine taps on K -> one MXU matmul (bf16).
        patches = []
        for t in range(th):
            taps = [rows[t + dy][dx:dx + w, :]
                    for dy in range(3) for dx in range(3)]
            patches.append(jnp.concatenate(taps, axis=-1))  # (W, 9*Cin) bf16
        patch = jnp.concatenate(patches, axis=0)             # (TH*W, 9*Cin)
        acc = jnp.dot(patch, w3_ref[...], preferred_element_type=jnp.float32)

    out = jnp.maximum(acc + shift_ref[...], 0.0)              # (TH*W, tco) f32
    o_ref[...] = out.reshape(th, w, -1).astype(o_ref.dtype)


def ppm_merge(xpad, w3, shift_m, *, tco, th):
    N, Hp2, Wp2, Cin = xpad.shape
    H, W = Hp2 - 2, Wp2 - 2
    K9, Cout = w3.shape
    n_co = Cout // tco
    n_h = H // th
    kern = functools.partial(_merge_kernel, th=th, w=W, cin=Cin,
                             split_taps=(Cin >= 1024))

    # TH+2 single-row views of the padded concat; row r of block hb is padded
    # row hb*TH + r (block size 1 on that axis -> block index == element row).
    row_specs = [
        pl.BlockSpec((pl.Squeezed(), pl.Squeezed(), Wp2, Cin),
                     lambda n, c, hb, r=r: (n, hb * th + r, 0, 0))
        for r in range(th + 2)
    ]
    return pl.pallas_call(
        kern,
        out_shape=jax.ShapeDtypeStruct((N, H, W, Cout), jnp.float32),
        # Cout-tile axis is NOT innermost -> the (9*Cin, tco) weight block is
        # re-DMA'd only when c changes, not every grid step.
        grid=(N, n_co, n_h),
        in_specs=row_specs + [
            pl.BlockSpec((K9, tco), lambda n, c, hb: (0, c)),
            pl.BlockSpec((1, tco), lambda n, c, hb: (0, c)),
        ],
        out_specs=pl.BlockSpec((pl.Squeezed(), th, W, tco),
                               lambda n, c, hb: (n, hb, 0, c)),
        compiler_params=pltpu.CompilerParams(
            dimension_semantics=("parallel", "arbitrary", "arbitrary"),
            vmem_limit_bytes=_vmem_limit()),
    )(*([xpad] * (th + 2) + [w3, shift_m]))


# ---------------------------------------------------------------------------
# Parameter init (deterministic, synthetic): BN folded, weights packed
# ---------------------------------------------------------------------------
def init_ppm(key, in_dim, reduction_dim, bins, H, W, merge_out=512, eps=1e-5):
    n_br = len(bins)
    assert n_br * reduction_dim == in_dim, "PPM needs len(bins)*reduction_dim == in_dim"
    C, R, CB = in_dim, reduction_dim, n_br * reduction_dim

    keys = jax.random.split(key, 5 * n_br + 5)
    idx = 0

    # Per-branch 1x1 conv (no bias) + BN, folded and stacked along output columns.
    wb = np.zeros((C, CB), np.float32)
    shift_b = np.zeros((1, CB), np.float32)
    for i in range(n_br):
        w1 = jax.random.normal(keys[idx], (R, C)) / np.sqrt(C); idx += 1
        gamma = 1.0 + 0.1 * jax.random.normal(keys[idx], (R,)); idx += 1
        beta = 0.1 * jax.random.normal(keys[idx], (R,)); idx += 1
        rmean = 0.1 * jax.random.normal(keys[idx], (R,)); idx += 1
        rvar = 1.0 + 0.1 * jnp.abs(jax.random.normal(keys[idx], (R,))); idx += 1
        scale = gamma / jnp.sqrt(rvar + eps)
        shift = beta - rmean * scale
        wb[:, i * R:(i + 1) * R] = np.asarray(jnp.transpose(w1) * scale[None, :])
        shift_b[0, i * R:(i + 1) * R] = np.asarray(shift)

    # Merge 3x3 conv (no bias) + BN, folded; (O, Cin, 3, 3) -> (9*Cin, O) with
    # K index = (kh*3 + kw)*Cin + cin (matches the in-kernel tap ordering).
    c2 = 2 * in_dim
    w3 = jax.random.normal(keys[idx], (merge_out, c2, 3, 3)) / np.sqrt(9 * c2); idx += 1
    gamma = 1.0 + 0.1 * jax.random.normal(keys[idx], (merge_out,)); idx += 1
    beta = 0.1 * jax.random.normal(keys[idx], (merge_out,)); idx += 1
    rmean = 0.1 * jax.random.normal(keys[idx], (merge_out,)); idx += 1
    rvar = 1.0 + 0.1 * jnp.abs(jax.random.normal(keys[idx], (merge_out,))); idx += 1
    scale = gamma / jnp.sqrt(rvar + eps)
    shift_m = (beta - rmean * scale).reshape(1, -1)
    w3_mat = jnp.transpose(w3 * scale[:, None, None, None],
                           (2, 3, 1, 0)).reshape(9 * c2, merge_out)

    # Stacked static pool / upsample matrices (kept in f32 for numerical
    # parity); pooled rows padded to a multiple of 16 (bf16/packing friendly).
    bb_total = sum(b * b for b in bins)
    bbp = ((bb_total + 15) // 16) * 16
    p_all = np.zeros((bbp, H * W), np.float32)
    a_all = np.zeros((H * W, bbp), np.float32)
    mask = np.zeros((bbp, CB), np.float32)
    off = 0
    for i, b in enumerate(bins):
        p_all[off:off + b * b, :] = np.kron(adaptive_pool_matrix(H, b),
                                            adaptive_pool_matrix(W, b))
        a_all[:, off:off + b * b] = np.kron(bilinear_matrix(H, b),
                                            bilinear_matrix(W, b))
        mask[off:off + b * b, i * R:(i + 1) * R] = 1.0
        off += b * b

    return {
        "wb": jnp.asarray(wb, jnp.bfloat16),
        "shift_b": jnp.asarray(shift_b, jnp.float32),
        "p_all": jnp.asarray(p_all, jnp.float32),                       # (BBp, HW)
        "a_all": jnp.asarray(a_all.reshape(H, W, bbp), jnp.float32),    # (H, W, BBp)
        "mask": jnp.asarray(mask, jnp.float32),
        "w3": w3_mat.astype(jnp.bfloat16),
        "shift_m": jnp.asarray(shift_m, jnp.float32),
    }


# ---------------------------------------------------------------------------
# Forward (Pallas) and pure-JAX reference
# ---------------------------------------------------------------------------
def ppm_forward(params, x_nchw, *, tq=None, tco=None, th=None):
    N, C, H, W = x_nchw.shape
    HW = H * W
    Cout = params["w3"].shape[1]

    if tq is None:    # pooling HW tile (pick larger at production sizes)
        tq = next((t for t in (128, 256, 512, 64, 32, 16, 8) if HW % t == 0), HW)
    if tco is None:   # merge Cout tile (use 128 on v7x at real Cin)
        tco = 256 if Cout % 256 == 0 else Cout
    if th is None:    # merge output rows per grid step
        th = next((t for t in (4, 2, 1) if H % t == 0), 1)

    x_nhwc = jnp.transpose(x_nchw, (0, 2, 3, 1)).astype(jnp.bfloat16)   # (N,H,W,C)
    y = ppm_pool_branches(x_nhwc.reshape(N, HW, C), params["p_all"], params["wb"],
                          params["shift_b"], params["mask"], tq=tq)     # (N,BBp,CB)
    xpad = ppm_concat_pad(x_nhwc, params["a_all"], y)          # (N,H+2,W+2,2C) bf16
    out = ppm_merge(xpad, params["w3"], params["shift_m"], tco=tco, th=th)
    # Dropout2d(p=0.1): eval-mode identity.
    return jnp.transpose(out, (0, 3, 1, 2))                             # NCHW


def ppm_forward_ref(params, x_nchw):
    """Pure-JAX reference mirroring the kernel's cast points."""
    N, C, H, W = x_nchw.shape
    HW = H * W
    xf = jnp.transpose(x_nchw, (0, 2, 3, 1)).reshape(N, HW, C).astype(jnp.bfloat16)

    pooled = jnp.einsum("ph,nhc->npc", params["p_all"], xf.astype(jnp.float32),
                        preferred_element_type=jnp.float32)
    z = jnp.einsum("npc,cd->npd", pooled.astype(jnp.bfloat16), params["wb"],
                   preferred_element_type=jnp.float32)
    y = jnp.maximum(z + params["shift_b"][None], 0.0) * params["mask"][None]
    a_flat = params["a_all"].reshape(HW, -1)
    up = jnp.einsum("qp,npd->nqd", a_flat, y, preferred_element_type=jnp.float32)
    cat = jnp.concatenate([xf, up.astype(jnp.bfloat16)], axis=-1)       # bf16
    xpad = jnp.pad(cat.reshape(N, H, W, 2 * C), ((0, 0), (1, 1), (1, 1), (0, 0)))
    taps = jnp.concatenate(
        [xpad[:, dy:dy + H, dx:dx + W, :].reshape(N, HW, 2 * C)
         for dy in range(3) for dx in range(3)], axis=-1)               # (N,HW,9*2C)
    acc = jnp.einsum("nhk,ko->nho", taps, params["w3"],
                     preferred_element_type=jnp.float32)
    out = jnp.maximum(acc + params["shift_m"][None], 0.0)
    return jnp.transpose(out.reshape(N, H, W, -1), (0, 3, 1, 2))


if __name__ == "__main__":
    # in_dim must equal len(bins) * reduction_dim so the merge conv sees 2*in_dim.
    in_dim, reduction_dim, bins = 8, 2, (1, 2, 3, 6)
    N, H, W = 2, 16, 16

    key = jax.random.PRNGKey(0)
    kx, kp = jax.random.split(key)
    x = jax.random.normal(kx, (N, in_dim, H, W), jnp.float32)

    params = init_ppm(kp, in_dim, reduction_dim, bins, H, W)

    out = jax.block_until_ready(ppm_forward(params, x))
    ref = jax.block_until_ready(ppm_forward_ref(params, x))

    assert out.shape == (N, 512, H, W), out.shape
    max_err = float(jnp.max(jnp.abs(out - ref)))
    assert bool(jnp.allclose(out, ref, atol=2e-2, rtol=2e-2)), f"mismatch: {max_err}"

    print("KERNEL_OK")
</pallas_src>

<mosaic_0001>
module attributes {stable_mosaic.version = 11 : i64} {
  func.func @_pool_kernel(%arg0: i32, %arg1: i32, %arg2: memref<1x128x8xbf16, #tpu.memory_space<vmem>>, %arg3: memref<64x128xf32, #tpu.memory_space<vmem>>, %arg4: memref<8x8xbf16, #tpu.memory_space<vmem>>, %arg5: memref<1x8xf32, #tpu.memory_space<vmem>>, %arg6: memref<64x8xf32, #tpu.memory_space<vmem>>, %arg7: memref<1x64x8xf32, #tpu.memory_space<vmem>>, %arg8: memref<64x8xf32, #tpu.memory_space<vmem>>) attributes {dimension_semantics = [#tpu.dimension_semantics<parallel>, #tpu.dimension_semantics<arbitrary>], iteration_bounds = array<i64: 2, 2>, scalar_prefetch = 0 : i64, scratch_operands = 1 : i64, tpu.core_type = #tpu.core_type<tc>, window_params = [{transform_indices = @transform_0, window_bounds = array<i64: 1, 128, 8>}, {transform_indices = @transform_1, window_bounds = array<i64: 64, 128>}, {pipeline_mode = #tpu.pipeline_mode<synchronous>, transform_indices = @transform_2, window_bounds = array<i64: 8, 8>}, {pipeline_mode = #tpu.pipeline_mode<synchronous>, transform_indices = @transform_3, window_bounds = array<i64: 1, 8>}, {pipeline_mode = #tpu.pipeline_mode<synchronous>, transform_indices = @transform_4, window_bounds = array<i64: 64, 8>}, {transform_indices = @transform_5, window_bounds = array<i64: 1, 64, 8>}]} {
    %c0_i32 = arith.constant 0 : i32
    %0 = arith.cmpi eq, %arg1, %c0_i32 : i32
    %1 = arith.extui %0 : i1 to i32
    %c0_i32_0 = arith.constant 0 : i32
    %2 = arith.cmpi ne, %1, %c0_i32_0 : i32
    scf.if %2 {
      %cst_10 = arith.constant 0.000000e+00 : f32
      %14 = vector.broadcast %cst_10 : f32 to vector<64x8xf32>
      %c0_11 = arith.constant 0 : index
      %c0_12 = arith.constant 0 : index
      %15 = vector.load %arg8[%c0_11, %c0_12] : memref<64x8xf32, #tpu.memory_space<vmem>>, vector<64x8xf32>
      tpu.vector_store %arg8[%c0_11, %c0_12], %14 {strides = array<i32>} : memref<64x8xf32, #tpu.memory_space<vmem>>, vector<64x8xf32>,
    } else {
    }
    %c0 = arith.constant 0 : index
    %c0_1 = arith.constant 0 : index
    %3 = vector.load %arg8[%c0, %c0_1] : memref<64x8xf32, #tpu.memory_space<vmem>>, vector<64x8xf32>
    %c0_2 = arith.constant 0 : index
    %c0_3 = arith.constant 0 : index
    %4 = vector.load %arg3[%c0_2, %c0_3] : memref<64x128xf32, #tpu.memory_space<vmem>>, vector<64x128xf32>
    %c0_4 = arith.constant 0 : index
    %c0_5 = arith.constant 0 : index
    %c0_6 = arith.constant 0 : index
    %5 = vector.load %arg2[%c0_4, %c0_5, %c0_6] : memref<1x128x8xbf16, #tpu.memory_space<vmem>>, vector<1x128x8xbf16>
    %6 = vector.shape_cast %5 : vector<1x128x8xbf16> to vector<128x8xbf16>
    %7 = arith.extf %6 : vector<128x8xbf16> to vector<128x8xf32>
    %cst = arith.constant dense<0.000000e+00> : vector<64x8xf32>
    %8 = tpu.matmul %4, %7, %cst {dimension_numbers = #tpu.dot_dimension_numbers<[1], [0], [0], [1], [0, 0, 1, 1], [], []>} : vector<64x128xf32>, vector<128x8xf32>, vector<64x8xf32> -> vector<64x8xf32>
    %9 = arith.addf %3, %8 : vector<64x8xf32>
    %c0_7 = arith.constant 0 : index
    %c0_8 = arith.constant 0 : index
    %10 = vector.load %arg8[%c0_7, %c0_8] : memref<64x8xf32, #tpu.memory_space<vmem>>, vector<64x8xf32>
    tpu.vector_store %arg8[%c0_7, %c0_8], %9 {strides = array<i32>} : memref<64x8xf32, #tpu.memory_space<vmem>>, vector<64x8xf32>,
    %c1_i32 = arith.constant 1 : i32
    %11 = arith.cmpi eq, %arg1, %c1_i32 : i32
    %12 = arith.extui %11 : i1 to i32
    %c0_i32_9 = arith.constant 0 : i32
    %13 = arith.cmpi ne, %12, %c0_i32_9 : i32
    scf.if %13 {
      %c0_10 = arith.constant 0 : index
      %c0_11 = arith.constant 0 : index
      %14 = vector.load %arg8[%c0_10, %c0_11] : memref<64x8xf32, #tpu.memory_space<vmem>>, vector<64x8xf32>
      %15 = arith.truncf %14 : vector<64x8xf32> to vector<64x8xbf16>
      %c0_12 = arith.constant 0 : index
      %c0_13 = arith.constant 0 : index
      %16 = vector.load %arg4[%c0_12, %c0_13] : memref<8x8xbf16, #tpu.memory_space<vmem>>, vector<8x8xbf16>
      %cst_14 = arith.constant dense<0.000000e+00> : vector<64x8xf32>
      %17 = tpu.matmul %15, %16, %cst_14 {dimension_numbers = #tpu.dot_dimension_numbers<[1], [0], [0], [1], [0, 0, 1, 1], [], []>} : vector<64x8xbf16>, vector<8x8xbf16>, vector<64x8xf32> -> vector<64x8xf32>
      %c0_15 = arith.constant 0 : index
      %c0_16 = arith.constant 0 : index
      %18 = vector.load %arg5[%c0_15, %c0_16] : memref<1x8xf32, #tpu.memory_space<vmem>>, vector<1x8xf32>
      %19 = vector.broadcast %18 : vector<1x8xf32> to vector<64x8xf32>
      %20 = arith.addf %17, %19 : vector<64x8xf32>
      %cst_17 = arith.constant 0.000000e+00 : f32
      %21 = vector.broadcast %cst_17 : f32 to vector<64x8xf32>
      %22 = arith.maximumf %20, %21 : vector<64x8xf32>
      %c0_18 = arith.constant 0 : index
      %c0_19 = arith.constant 0 : index
      %23 = vector.load %arg6[%c0_18, %c0_19] : memref<64x8xf32, #tpu.memory_space<vmem>>, vector<64x8xf32>
      %24 = arith.mulf %22, %23 : vector<64x8xf32>
      %c0_20 = arith.constant 0 : index
      %c0_21 = arith.constant 0 : index
      %c0_22 = arith.constant 0 : index
      %25 = vector.load %arg7[%c0_20, %c0_21, %c0_22] : memref<1x64x8xf32, #tpu.memory_space<vmem>>, vector<1x64x8xf32>
      %26 = vector.shape_cast %25 : vector<1x64x8xf32> to vector<64x8xf32>
      %27 = vector.shape_cast %24 : vector<64x8xf32> to vector<1x64x8xf32>
      tpu.vector_store %arg7[%c0_20, %c0_21, %c0_22], %27 {strides = array<i32>} : memref<1x64x8xf32, #tpu.memory_space<vmem>>, vector<1x64x8xf32>,
    } else {
    }
    return
  }
  func.func @transform_0(%arg0: i32, %arg1: i32) -> (i32, i32, i32) {
    %c0_i32 = arith.constant 0 : i32
    %c0_i32_0 = arith.constant 0 : i32
    return %arg0, %arg1, %c0_i32 : i32, i32, i32
  }
  func.func @transform_1(%arg0: i32, %arg1: i32) -> (i32, i32) {
    %c0_i32 = arith.constant 0 : i32
    %c0_i32_0 = arith.constant 0 : i32
    return %c0_i32, %arg1 : i32, i32
  }
  func.func @transform_2(%arg0: i32, %arg1: i32) -> (i32, i32) {
    %c0_i32 = arith.constant 0 : i32
    %c0_i32_0 = arith.constant 0 : i32
    %c0_i32_1 = arith.constant 0 : i32
    return %c0_i32, %c0_i32_0 : i32, i32
  }
  func.func @transform_3(%arg0: i32, %arg1: i32) -> (i32, i32) {
    %c0_i32 = arith.constant 0 : i32
    %c0_i32_0 = arith.constant 0 : i32
    %c0_i32_1 = arith.constant 0 : i32
    return %c0_i32, %c0_i32_0 : i32, i32
  }
  func.func @transform_4(%arg0: i32, %arg1: i32) -> (i32, i32) {
    %c0_i32 = arith.constant 0 : i32
    %c0_i32_0 = arith.constant 0 : i32
    %c0_i32_1 = arith.constant 0 : i32
    return %c0_i32, %c0_i32_0 : i32, i32
  }
  func.func @transform_5(%arg0: i32, %arg1: i32) -> (i32, i32, i32) {
    %c0_i32 = arith.constant 0 : i32
    %c0_i32_0 = arith.constant 0 : i32
    %c0_i32_1 = arith.constant 0 : i32
    return %arg0, %c0_i32, %c0_i32_0 : i32, i32, i32
  }
}

</mosaic_0001>

<llo_original>
// kernel: tpu_custom_call.1
$region0: #{tpu_custom_call.1}
  #allocation0 [shape = 'u32[]', space=smem, size = 0x4, offset = 0x4, fixed_abs, tag = 'smem constant byte address 0x4 - core index']
  #allocation1 [shape = 'u32[144,128]{1,0:T(1,128)}', space=vmem, size = 0x12000, scoped, tag = 'internal scratch']
  #allocation2 [shape = 'f32[64,8]{1,0:T(8,128)}', space=vmem, size = 0x8000, scoped, tag = 'scratch operand']
  %s0 = inlined_call_operand.vmem [shape: bf16[2,256,8], index: 0, kind: input, shape index: {}]
  %s1 = inlined_call_operand.vmem [shape: f32[64,256], index: 1, kind: input, shape index: {}]
  %s2 = inlined_call_operand.vmem [shape: bf16[8,8], index: 2, kind: input, shape index: {}]
  %s3 = inlined_call_operand.vmem [shape: f32[1,8], index: 3, kind: input, shape index: {}]
  %s4 = inlined_call_operand.vmem [shape: f32[64,8], index: 4, kind: input, shape index: {}]
  %s5 = inlined_call_operand.vmem [shape: f32[2,64,8], index: 5, kind: output, shape index: {}]
  %s6 = sld [smem:[#allocation0]]
  $region99: #{tpu_custom_call.1} parent=0
    _
  %s8 = ssub.s32 1, %s6
  %s9 = scalar_select 0, %s8, %s6
  $region1: #{tpu_custom_call.1} parent=0
    #allocation3 [shape = 'u8[65536]{0}', space=vmem, size = 0x10000, scoped, tag = 'input window, operand 1']
    loop: start=0, step=1, limit=6
    $region2: #{tpu_custom_call.1} parent=1 // loop_pre_header
      _
    $region3: #{tpu_custom_call.1} parent=1 // loop_header
      %s11 = sphi 0, %s15
      %p12 = scmp.ge.s32.totalorder %s11, 6
      %s18 = sphi 0, %s30
      %s19 = sphi 0, %s26
      %s20 = sphi 0, %s18
      %s21 = sphi 0, %s19
      %s22 = sphi 0, %s20
      %s23 = sphi 0, %s21
      %s35 = sphi 0, %s37
      %s38 = sphi 0, %s35
      %s39 = sphi 0, %s38
      %s55 = sphi 0, %s39
      %s61 = sphi 0, %s63
      %s64 = sphi 0, %s61
      %s65 = sphi 0, %s64
      %s81 = sphi 0, %s65
      %s85 = sphi 0, %s85
      %s87 = sphi 0, %s85
      %s88 = sphi 0, %s87
      %s102 = sphi 0, %s88
      %s106 = sphi 0, %s106
      %s108 = sphi 0, %s106
      %s109 = sphi 0, %s108
      %s123 = sphi 0, %s109
      %s127 = sphi 0, %s127
      %s129 = sphi 0, %s127
      %s130 = sphi 0, %s129
      %s144 = sphi 0, %s130
      %s150 = sphi 0, %s152
      %s153 = sphi 0, %s150
      %s154 = sphi 0, %s153
      %s170 = sphi 0, %s154
    $region4: #{tpu_custom_call.1} parent=1 // loop_header_branch
      %14 = sbr.rel (%p12) target = $region8
    $region5: #{tpu_custom_call.1} parent=1 // loop_body
      %s16 = ssub.s32 %s11, 1
      %s17 = ssub.s32 %s11, 2
      %s24 = sadd.s32 1, %s19
      %p25 = scmp.ge.s32.totalorder %s24, 2
      %s26 = scalar_select %p25, 0, %s24
      %s27 = sadd.s32 1, %s18
      %s28 = scalar_select %p25, %s27, %s18
      %p29 = scmp.ge.s32.totalorder %s28, 2
      %s30 = scalar_select %p29, 0, %s28
      %s31 = ssub.s32 %s18, %s30
      %s32 = ssub.s32 %s19, %s26
      %s33 = sor.u32 %s31, %s32
      %p34 = scmp.eq.s32.totalorder %s33, 0
      %s36 = sadd.s32 %s35, 1
      %s37 = scalar_select %p34, %s35, %s36
      %p40 = pneg %p34
      %p41 = scmp.eq.s32.totalorder %s11, 3
      %p42 = por %p40, %p41
      %p43 = scmp.ne.s32.totalorder %s35, %s38
      %p44 = scmp.eq.s32.totalorder %s11, 0
      %p45 = por %p43, %p44
      %p46 = scmp.ne.s32.totalorder %s35, %s38
      %p47 = scmp.eq.s32.totalorder %s16, 3
      %p48 = por %p46, %p47
      %p49 = scmp.ne.s32.totalorder %s38, %s39
      %p50 = scmp.eq.s32.totalorder %s16, 0
      %p51 = por %p49, %p50
      %p52 = scmp.ne.s32.totalorder %s38, %s39
      %p53 = scmp.eq.s32.totalorder %s17, 3
      %p54 = por %p52, %p53
      %p56 = scmp.ne.s32.totalorder %s39, %s55
      %p57 = scmp.eq.s32.totalorder %s17, 0
      %p58 = por %p56, %p57
      %s59 = ssub.s32 %s19, %s26
      %p60 = scmp.eq.s32.totalorder %s59, 0
      %s62 = sadd.s32 %s61, 1
      %s63 = scalar_select %p60, %s61, %s62
      %p66 = pneg %p60
      %p67 = scmp.eq.s32.totalorder %s11, 3
      %p68 = por %p66, %p67
      %p69 = scmp.ne.s32.totalorder %s61, %s64
      %p70 = scmp.eq.s32.totalorder %s11, 0
      %p71 = por %p69, %p70
      %p72 = scmp.ne.s32.totalorder %s61, %s64
      %p73 = scmp.eq.s32.totalorder %s16, 3
      %p74 = por %p72, %p73
      %p75 = scmp.ne.s32.totalorder %s64, %s65
      %p76 = scmp.eq.s32.totalorder %s16, 0
      %p77 = por %p75, %p76
      %p78 = scmp.ne.s32.totalorder %s64, %s65
      %p79 = scmp.eq.s32.totalorder %s17, 3
      %p80 = por %p78, %p79
      %p82 = scmp.ne.s32.totalorder %s65, %s81
      %p83 = scmp.eq.s32.totalorder %s17, 0
      %p84 = por %p82, %p83
      %s86 = sadd.s32 %s85, 1
      %p89 = scmp.eq.s32.totalorder %s11, 3
      %p90 = scmp.ne.s32.totalorder %s85, %s87
      %p91 = scmp.eq.s32.totalorder %s11, 0
      %p92 = por %p90, %p91
      %p93 = scmp.ne.s32.totalorder %s85, %s87
      %p94 = scmp.eq.s32.totalorder %s16, 3
      %p95 = por %p93, %p94
      %p96 = scmp.ne.s32.totalorder %s87, %s88
      %p97 = scmp.eq.s32.totalorder %s16, 0
      %p98 = por %p96, %p97
      %p99 = scmp.ne.s32.totalorder %s87, %s88
      %p100 = scmp.eq.s32.totalorder %s17, 3
      %p101 = por %p99, %p100
      %p103 = scmp.ne.s32.totalorder %s88, %s102
      %p104 = scmp.eq.s32.totalorder %s17, 0
      %p105 = por %p103, %p104
      %s107 = sadd.s32 %s106, 1
      %p110 = scmp.eq.s32.totalorder %s11, 3
      %p111 = scmp.ne.s32.totalorder %s106, %s108
      %p112 = scmp.eq.s32.totalorder %s11, 0
      %p113 = por %p111, %p112
      %p114 = scmp.ne.s32.totalorder %s106, %s108
      %p115 = scmp.eq.s32.totalorder %s16, 3
      %p116 = por %p114, %p115
      %p117 = scmp.ne.s32.totalorder %s108, %s109
      %p118 = scmp.eq.s32.totalorder %s16, 0
      %p119 = por %p117, %p118
      %p120 = scmp.ne.s32.totalorder %s108, %s109
      %p121 = scmp.eq.s32.totalorder %s17, 3
      %p122 = por %p120, %p121
      %p124 = scmp.ne.s32.totalorder %s109, %s123
      %p125 = scmp.eq.s32.totalorder %s17, 0
      %p126 = por %p124, %p125
      %s128 = sadd.s32 %s127, 1
      %p131 = scmp.eq.s32.totalorder %s11, 3
      %p132 = scmp.ne.s32.totalorder %s127, %s129
      %p133 = scmp.eq.s32.totalorder %s11, 0
      %p134 = por %p132, %p133
      %p135 = scmp.ne.s32.totalorder %s127, %s129
      %p136 = scmp.eq.s32.totalorder %s16, 3
      %p137 = por %p135, %p136
      %p138 = scmp.ne.s32.totalorder %s129, %s130
      %p139 = scmp.eq.s32.totalorder %s16, 0
      %p140 = por %p138, %p139
      %p141 = scmp.ne.s32.totalorder %s129, %s130
      %p142 = scmp.eq.s32.totalorder %s17, 3
      %p143 = por %p141, %p142
      %p145 = scmp.ne.s32.totalorder %s130, %s144
      %p146 = scmp.eq.s32.totalorder %s17, 0
      %p147 = por %p145, %p146
      %s148 = ssub.s32 %s18, %s30
      %p149 = scmp.eq.s32.totalorder %s148, 0
      %s151 = sadd.s32 %s150, 1
      %s152 = scalar_select %p149, %s150, %s151
      %p155 = pneg %p149
      %p156 = scmp.eq.s32.totalorder %s11, 3
      %p157 = por %p155, %p156
      %p158 = scmp.ne.s32.totalorder %s150, %s153
      %p159 = scmp.eq.s32.totalorder %s11, 0
      %p160 = por %p158, %p159
      %p161 = scmp.ne.s32.totalorder %s150, %s153
      %p162 = scmp.eq.s32.totalorder %s16, 3
      %p163 = por %p161, %p162
      %p164 = scmp.ne.s32.totalorder %s153, %s154
      %p165 = scmp.eq.s32.totalorder %s16, 0
      %p166 = por %p164, %p165
      %p167 = scmp.ne.s32.totalorder %s153, %s154
      %p168 = scmp.eq.s32.totalorder %s17, 3
      %p169 = por %p167, %p168
      %p171 = scmp.ne.s32.totalorder %s154, %s170
      %p172 = scmp.eq.s32.totalorder %s17, 0
      %p173 = por %p171, %p172
      %p174 = scmp.le.s32.totalorder 1, %s11
      %p175 = scmp.lt.s32.totalorder %s11, 5
      %p176 = pnand %p174, %p175
      %p177 = pneg %p176
      // Predicated region
      $region9: #{tpu_custom_call.1} parent=5 // pred_check
        _
      $region10: #{tpu_custom_call.1} parent=5 // pred_check_branch
        %179 = sbr.rel (%p176) target = $region12
      $region11: #{tpu_custom_call.1} parent=5 // pred_region
        %s180 = ssub.s32 %s11, 1
        // Predicated region
        $region13: #{tpu_custom_call.1} parent=11 // pred_check
          %p181 = pneg %p98
        $region14: #{tpu_custom_call.1} parent=11 // pred_check_branch
          %183 = sbr.rel (%p181) target = $region16
        $region15: #{tpu_custom_call.1} parent=11 // pred_region
          _
        $region16: #{tpu_custom_call.1} parent=11 // pred_fallthru
          _
        // Predicated region
        $region17: #{tpu_custom_call.1} parent=11 // pred_check
          %p184 = pneg %p119
        $region18: #{tpu_custom_call.1} parent=11 // pred_check_branch
          %186 = sbr.rel (%p184) target = $region20
        $region19: #{tpu_custom_call.1} parent=11 // pred_region
          _
        $region20: #{tpu_custom_call.1} parent=11 // pred_fallthru
          _
        // Predicated region
        $region21: #{tpu_custom_call.1} parent=11 // pred_check
          %p187 = pneg %p140
        $region22: #{tpu_custom_call.1} parent=11 // pred_check_branch
          %189 = sbr.rel (%p187) target = $region24
        $region23: #{tpu_custom_call.1} parent=11 // pred_region
          _
        $region24: #{tpu_custom_call.1} parent=11 // pred_fallthru
          _
      $region12: #{tpu_custom_call.1} parent=5 // pred_fallthru
        _
      %p190 = scmp.lt.s32.totalorder %s11, 4
      // Predicated region
      $region25: #{tpu_custom_call.1} parent=5 // pred_check
        %p191 = pneg %p190
      $region26: #{tpu_custom_call.1} parent=5 // pred_check_branch
        %193 = sbr.rel (%p191) target = $region28
      $region27: #{tpu_custom_call.1} parent=5 // pred_region
        // Predicated region
        $region29: #{tpu_custom_call.1} parent=27 // pred_check
          %p194 = pneg %p45
        $region30: #{tpu_custom_call.1} parent=27 // pred_check_branch
          %196 = sbr.rel (%p194) target = $region32
        $region31: #{tpu_custom_call.1} parent=27 // pred_region
          %s197 = smul.u32 16, %s19
          %p198 = scmp.lt.s32.totalorder %s18, 1
          %s199 = scalar_select %p198, %s18, 1
          %p200 = scmp.lt.s32.totalorder %s197, 31
          %s201 = scalar_select %p200, %s197, 31
          %s202 = smul.addr %s199, 32
          %s203 = sadd.s32 %s201, %s202
          %s204 = smul.addr %s203, 4
          %s205 = scalar_lea.vmem %s0, %s204
          %s206 = smul.u32 16, %s19
        $region32: #{tpu_custom_call.1} parent=27 // pred_fallthru
          _
        // Predicated region
        $region33: #{tpu_custom_call.1} parent=27 // pred_check
          %p207 = pneg %p71
        $region34: #{tpu_custom_call.1} parent=27 // pred_check_branch
          %209 = sbr.rel (%p207) target = $region36
        $region35: #{tpu_custom_call.1} parent=27 // pred_region
          %s210 = sand.u32 %s61, 1
          %s211 = sand.u32 %s61, 1
          %s212 = smul.addr %s211, 64
          %s213 = scalar_lea.vmem [#allocation3], %s212
          %s214 = smul.addr %s19, 8
          %s215 = scalar_lea.vmem %s1, %s214
          // Predicated region
          $region37: #{tpu_custom_call.1} parent=35 // pred_check
            _
          $region38: #{tpu_custom_call.1} parent=35 // pred_check_branch
            %217 = sbr.rel (0) target = $region40
          $region39: #{tpu_custom_call.1} parent=35 // pred_region
            // Predicated region
            $region41: #{tpu_custom_call.1} parent=39 // pred_check
              _
            $region42: #{tpu_custom_call.1} parent=39 // pred_check_branch
              %219 = sbr.rel (0) target = $region44
            $region43: #{tpu_custom_call.1} parent=39 // pred_region
              // Predicated region
              $region56: #{tpu_custom_call.1} parent=43 // pred_check
                _
              $region57: #{tpu_custom_call.1} parent=43 // pred_check_branch
                %248 = sbr.rel (0) target = $region59
              $region58: #{tpu_custom_call.1} parent=43 // pred_region
                loop: start=0, step=1, limit=1
                $region60: #{tpu_custom_call.1} parent=58 // loop_pre_header
                  _
                $region61: #{tpu_custom_call.1} parent=58 // loop_header
                  %s250 = sphi 0, %s254
                  %p251 = scmp.ge.s32.totalorder %s250, 1
                  %s255 = sphi %s215, %s215
                  %s256 = sphi %s213, %s213
                $region62: #{tpu_custom_call.1} parent=58 // loop_header_branch
                  %253 = sbr.rel (%p251) target = $region66
                $region63: #{tpu_custom_call.1} parent=58 // loop_body
                  %v257 = vld [vmem:[%s255] sm:$0xff]
                  %258 = vst [vmem:[%s256] sm:$0xff] %v257
                  %v259 = vld [vmem:[%s255 + $0x10] sm:$0xff]
                  %260 = vst [vmem:[%s256 + $0x8] sm:$0xff] %v259
                  %v261 = vld [vmem:[%s255 + $0x20] sm:$0xff]
                  %262 = vst [vmem:[%s256 + $0x10] sm:$0xff] %v261
                  %v263 = vld [vmem:[%s255 + $0x30] sm:$0xff]
                  %264 = vst [vmem:[%s256 + $0x18] sm:$0xff] %v263
                  %v265 = vld [vmem:[%s255 + $0x40] sm:$0xff]
                  %266 = vst [vmem:[%s256 + $0x20] sm:$0xff] %v265
                  %v267 = vld [vmem:[%s255 + $0x50] sm:$0xff]
                  %268 = vst [vmem:[%s256 + $0x28] sm:$0xff] %v267
                  %v269 = vld [vmem:[%s255 + $0x60] sm:$0xff]
                  %270 = vst [vmem:[%s256 + $0x30] sm:$0xff] %v269
                  %v271 = vld [vmem:[%s255 + $0x70] sm:$0xff]
                  %272 = vst [vmem:[%s256 + $0x38] sm:$0xff] %v271
                $region64: #{tpu_custom_call.1} parent=58 // loop_footer
                  %s254 = sadd.s32 1, %s250
                $region65: #{tpu_custom_call.1} parent=58 // loop_footer_branch
                  %249 = sbr.rel target = $region61
                $region66: #{tpu_custom_call.1} parent=58 // loop_exit
                  _
              $region59: #{tpu_custom_call.1} parent=43 // pred_fallthru
                _
              // Predicated region
              $region67: #{tpu_custom_call.1} parent=43 // pred_check
                _
              $region68: #{tpu_custom_call.1} parent=43 // pred_check_branch
                %274 = sbr.rel target = $region70
              $region69: #{tpu_custom_call.1} parent=43 // pred_region
                _
              $region70: #{tpu_custom_call.1} parent=43 // pred_fallthru
                _
            $region44: #{tpu_custom_call.1} parent=39 // pred_fallthru
              _
            // Predicated region
            $region45: #{tpu_custom_call.1} parent=39 // pred_check
              _
            $region46: #{tpu_custom_call.1} parent=39 // pred_check_branch
              %221 = sbr.rel target = $region48
            $region47: #{tpu_custom_call.1} parent=39 // pred_region
              loop: start=0, step=1, limit=1
              $region49: #{tpu_custom_call.1} parent=47 // loop_pre_header
                _
              $region50: #{tpu_custom_call.1} parent=47 // loop_header
                %s224 = sphi 0, %s228
                %p225 = scmp.ge.s32.totalorder %s224, 1
                %s229 = sphi %s215, %s215
                %s230 = sphi %s213, %s213
              $region51: #{tpu_custom_call.1} parent=47 // loop_header_branch
                %227 = sbr.rel (%p225) target = $region55
              $region52: #{tpu_custom_call.1} parent=47 // loop_body
                %v231 = vld [vmem:[%s229] sm:$0xff]
                %232 = vst [vmem:[%s230] sm:$0xff] %v231
                %v233 = vld [vmem:[%s229 + $0x10] sm:$0xff]
                %234 = vst [vmem:[%s230 + $0x8] sm:$0xff] %v233
                %v235 = vld [vmem:[%s229 + $0x20] sm:$0xff]
                %236 = vst [vmem:[%s230 + $0x10] sm:$0xff] %v235
                %v237 = vld [vmem:[%s229 + $0x30] sm:$0xff]
                %238 = vst [vmem:[%s230 + $0x18] sm:$0xff] %v237
                %v239 = vld [vmem:[%s229 + $0x40] sm:$0xff]
                %240 = vst [vmem:[%s230 + $0x20] sm:$0xff] %v239
                %v241 = vld [vmem:[%s229 + $0x50] sm:$0xff]
                %242 = vst [vmem:[%s230 + $0x28] sm:$0xff] %v241
                %v243 = vld [vmem:[%s229 + $0x60] sm:$0xff]
                %244 = vst [vmem:[%s230 + $0x30] sm:$0xff] %v243
                %v245 = vld [vmem:[%s229 + $0x70] sm:$0xff]
                %246 = vst [vmem:[%s230 + $0x38] sm:$0xff] %v245
              $region53: #{tpu_custom_call.1} parent=47 // loop_footer
                %s228 = sadd.s32 1, %s224
              $region54: #{tpu_custom_call.1} parent=47 // loop_footer_branch
                %223 = sbr.rel target = $region50
              $region55: #{tpu_custom_call.1} parent=47 // loop_exit
                _
            $region48: #{tpu_custom_call.1} parent=39 // pred_fallthru
              _
          $region40: #{tpu_custom_call.1} parent=35 // pred_fallthru
            _
          %275 = vnop
        $region36: #{tpu_custom_call.1} parent=27 // pred_fallthru
          _
      $region28: #{tpu_custom_call.1} parent=5 // pred_fallthru
        _
      %p276 = scmp.le.s32.totalorder 1, %s11
      %p277 = scmp.lt.s32.totalorder %s11, 5
      %p278 = pnand %p276, %p277
      %p279 = pneg %p278
      // Predicated region
      $region71: #{tpu_custom_call.1} parent=5 // pred_check
        _
      $region72: #{tpu_custom_call.1} parent=5 // pred_check_branch
        %281 = sbr.rel (%p278) target = $region74
      $region73: #{tpu_custom_call.1} parent=5 // pred_region
        %s282 = ssub.s32 %s11, 1
        %s283 = sand.u32 %s64, 1
        %s284 = sand.u32 %s64, 1
        %s285 = smul.addr %s284, 64
        %s286 = scalar_lea.vmem [#allocation3], %s285
        // Predicated region
        $region75: #{tpu_custom_call.1} parent=73 // pred_check
          %p287 = pneg %p77
        $region76: #{tpu_custom_call.1} parent=73 // pred_check_branch
          %289 = sbr.rel (%p287) target = $region78
        $region77: #{tpu_custom_call.1} parent=73 // pred_region
          _
        $region78: #{tpu_custom_call.1} parent=73 // pred_fallthru
          _
        %s290 = smul.u32 16, %s21
        %p291 = scmp.lt.s32.totalorder %s20, 1
        %s292 = scalar_select %p291, %s20, 1
        %p293 = scmp.lt.s32.totalorder %s290, 31
        %s294 = scalar_select %p293, %s290, 31
        %s295 = smul.addr %s292, 32
        %s296 = sadd.s32 %s294, %s295
        %s297 = smul.addr %s296, 4
        %s298 = scalar_lea.vmem %s0, %s297
        %p299 = pneg %p51
        %p300 = pneg %p48
        %s301 = sand.u32 %s64, 1
        %s302 = sand.u32 %s64, 1
        %s303 = smul.addr %s302, 64
        %s304 = scalar_lea.vmem [#allocation3], %s303
        %p305 = pneg %p77
        %p306 = pneg %p74
        %p307 = pneg %p98
        %p308 = pneg %p95
        %p309 = pneg %p119
        %p310 = pneg %p116
        %p311 = pneg %p140
        %p312 = pneg %p137
        %p313 = pneg %p166
        %p314 = pneg %p163
        %p315 = scmp.lt.s32.totalorder %s20, 1
        %s316 = scalar_select %p315, %s20, 1
        %s317 = smul.addr %s316, 8
        %s318 = smul.addr %s317, 8
        %s319 = scalar_lea.vmem %s5, %s318
        %s320 = smul.u32 16, %s21
        %p321 = scmp.lt.s32.totalorder %s20, 1
        %s322 = scalar_select %p321, %s20, 1
        %p323 = scmp.lt.s32.totalorder %s320, 31
        %s324 = scalar_select %p323, %s320, 31
        %s325 = smul.addr %s322, 32
        %s326 = sadd.s32 %s324, %s325
        %s327 = smul.addr %s326, 4
        %s328 = scalar_lea.vmem %s0, %s327
        %s329 = smul.u32 16, %s21
        %p330 = scmp.lt.s32.totalorder %s20, 1
        %s331 = scalar_select %p330, %s20, 1
        %s332 = smul.addr %s331, 8
        %s333 = smul.addr %s332, 8
        %s334 = scalar_lea.vmem %s5, %s333
        %p336 = scmp.eq.s32.totalorder %s21, 0
        // Predicated region
        $region79: #{tpu_custom_call.1} parent=73 // pred_check
          %p337 = pneg %p336
        $region80: #{tpu_custom_call.1} parent=73 // pred_check_branch
          %339 = sbr.rel (%p337) target = $region82
        $region81: #{tpu_custom_call.1} parent=73 // pred_region
          %vm340 = vcmask 64512
          %341 = vst.msk [vmem:[#allocation2] sm:$0xff] %vm340, 0.0
          %342 = vst.msk [vmem:[#allocation2 + $0x8] sm:$0xff] %vm340, 0.0
          %343 = vst.msk [vmem:[#allocation2 + $0x10] sm:$0xff] %vm340, 0.0
          %344 = vst.msk [vmem:[#allocation2 + $0x18] sm:$0xff] %vm340, 0.0
          %345 = vst.msk [vmem:[#allocation2 + $0x20] sm:$0xff] %vm340, 0.0
          %346 = vst.msk [vmem:[#allocation2 + $0x28] sm:$0xff] %vm340, 0.0
          %347 = vst.msk [vmem:[#allocation2 + $0x30] sm:$0xff] %vm340, 0.0
          %348 = vst.msk [vmem:[#allocation2 + $0x38] sm:$0xff] %vm340, 0.0
        $region82: #{tpu_custom_call.1} parent=73 // pred_fallthru
          _
        %v349 = vld [vmem:[#allocation2] sm:$0xff]
        %v350 = vld [vmem:[#allocation2 + $0x8] sm:$0xff]
        %v351 = vld [vmem:[#allocation2 + $0x10] sm:$0xff]
        %v352 = vld [vmem:[#allocation2 + $0x18] sm:$0xff]
        %v353 = vld [vmem:[#allocation2 + $0x20] sm:$0xff]
        %v354 = vld [vmem:[#allocation2 + $0x28] sm:$0xff]
        %v355 = vld [vmem:[#allocation2 + $0x30] sm:$0xff]
        %v356 = vld [vmem:[#allocation2 + $0x38] sm:$0xff]
        %v357 = vld [vmem:[%s286] sm:$0xff]
        %v358 = vld [vmem:[%s286 + $0x8] sm:$0xff]
        %v359 = vld [vmem:[%s286 + $0x10] sm:$0xff]
        %v360 = vld [vmem:[%s286 + $0x18] sm:$0xff]
        %v361 = vld [vmem:[%s286 + $0x20] sm:$0xff]
        %v362 = vld [vmem:[%s286 + $0x28] sm:$0xff]
        %v363 = vld [vmem:[%s286 + $0x30] sm:$0xff]
        %v364 = vld [vmem:[%s286 + $0x38] sm:$0xff]
        %v365 = vld [vmem:[%s328] sm:$0xf]
        %v366 = vld [vmem:[%s328 + $0x4] sm:$0xf]
        %v367 = vld [vmem:[%s328 + $0x8] sm:$0xf]
        %v368 = vld [vmem:[%s328 + $0xc] sm:$0xf]
        %v369 = vld [vmem:[%s328 + $0x10] sm:$0xf]
        %v370 = vld [vmem:[%s328 + $0x14] sm:$0xf]
        %v371 = vld [vmem:[%s328 + $0x18] sm:$0xf]
        %v372 = vld [vmem:[%s328 + $0x1c] sm:$0xf]
        %v373 = vld [vmem:[%s328 + $0x20] sm:$0xf]
        %v374 = vld [vmem:[%s328 + $0x24] sm:$0xf]
        %v375 = vld [vmem:[%s328 + $0x28] sm:$0xf]
        %v376 = vld [vmem:[%s328 + $0x2c] sm:$0xf]
        %v377 = vld [vmem:[%s328 + $0x30] sm:$0xf]
        %v378 = vld [vmem:[%s328 + $0x34] sm:$0xf]
        %v379 = vld [vmem:[%s328 + $0x38] sm:$0xf]
        %v380 = vld [vmem:[%s328 + $0x3c] sm:$0xf]
        %v381 = vunpack.c.l.bf16 %v365
        %v382 = vunpack.c.l.bf16 %v366
        %v383 = vunpack.c.l.bf16 %v367
        %v384 = vunpack.c.l.bf16 %v368
        %v385 = vunpack.c.l.bf16 %v369
        %v386 = vunpack.c.l.bf16 %v370
        %v387 = vunpack.c.l.bf16 %v371
        %v388 = vunpack.c.l.bf16 %v372
        %v389 = vunpack.c.l.bf16 %v373
        %v390 = vunpack.c.l.bf16 %v374
        %v391 = vunpack.c.l.bf16 %v375
        %v392 = vunpack.c.l.bf16 %v376
        %v393 = vunpack.c.l.bf16 %v377
        %v394 = vunpack.c.l.bf16 %v378
        %v395 = vunpack.c.l.bf16 %v379
        %v396 = vunpack.c.l.bf16 %v380
        %397 = vmatprep.subr.mxu0 0.0
        %398 = vmatpush1.msra.mxu0 %v381
        %399 = vmatprep.subr.mxu0 0.0
        %400 = vmatpush1.msra.mxu0 %v382
        %401 = vmatprep.subr.mxu0 0.0
        %402 = vmatpush1.msra.mxu0 %v383
        %403 = vmatprep.subr.mxu0 0.0
        %404 = vmatpush1.msra.mxu0 %v384
        %405 = vmatprep.subr.mxu0 0.0
        %406 = vmatpush1.msra.mxu0 %v385
        %407 = vmatprep.subr.mxu0 0.0
        %408 = vmatpush1.msra.mxu0 %v386
        %409 = vmatprep.subr.mxu0 0.0
        %410 = vmatpush1.msra.mxu0 %v387
        %411 = vmatprep.subr.mxu0 0.0
        %412 = vmatpush1.msra.mxu0 %v388
        %413 = vmatprep.subr.mxu0 0.0
        %414 = vmatpush1.msra.mxu0 %v389
        %415 = vmatprep.subr.mxu0 0.0
        %416 = vmatpush1.msra.mxu0 %v390
        %417 = vmatprep.subr.mxu0 0.0
        %418 = vmatpush1.msra.mxu0 %v391
        %419 = vmatprep.subr.mxu0 0.0
        %420 = vmatpush1.msra.mxu0 %v392
        %421 = vmatprep.subr.mxu0 0.0
        %422 = vmatpush1.msra.mxu0 %v393
        %423 = vmatprep.subr.mxu0 0.0
        %424 = vmatpush1.msra.mxu0 %v394
        %425 = vmatprep.subr.mxu0 0.0
        %426 = vmatpush1.msra.mxu0 %v395
        %427 = vmatprep.subr.mxu0 0.0
        %428 = vmatpush1.msra.mxu0 %v396
        %429 = vmatprep.subr.mxu0 0.0
        %430 = vmatpush1.msra.mxu0 0.0
        %431 = vmatprep.subr.mxu0 0.0
        %432 = vmatpush1.msra.mxu0 0.0
        %433 = vmatprep.subr.mxu0 0.0
        %434 = vmatpush1.msra.mxu0 0.0
        %435 = vmatprep.subr.mxu0 0.0
        %436 = vmatpush1.msra.mxu0 0.0
        %437 = vmatprep.subr.mxu0 0.0
        %438 = vmatpush1.msra.mxu0 0.0
        %439 = vmatprep.subr.mxu0 0.0
        %440 = vmatpush1.msra.mxu0 0.0
        %441 = vmatprep.subr.mxu0 0.0
        %442 = vmatpush1.msra.mxu0 0.0
        %443 = vmatprep.subr.mxu0 0.0
        %444 = vmatpush1.msra.mxu0 0.0
        %445 = vmatprep.subr.mxu0 0.0
        %446 = vmatpush1.msra.mxu0 0.0
        %447 = vmatprep.subr.mxu0 0.0
        %448 = vmatpush1.msra.mxu0 0.0
        %449 = vmatprep.subr.mxu0 0.0
        %450 = vmatpush1.msra.mxu0 0.0
        %451 = vmatprep.subr.mxu0 0.0
        %452 = vmatpush1.msra.mxu0 0.0
        %453 = vmatprep.subr.mxu0 0.0
        %454 = vmatpush1.msra.mxu0 0.0
        %455 = vmatprep.subr.mxu0 0.0
        %456 = vmatpush1.msra.mxu0 0.0
        %457 = vmatprep.subr.mxu0 0.0
        %458 = vmatpush1.msra.mxu0 0.0
        %459 = vmatprep.subr.mxu0 0.0
        %460 = vmatpush1.msra.mxu0 0.0
        %461 = vmatprep.mubr.f32.mxu0 0.0
        %462 = vmatmul.mubr.f32.gmra.mrb[0].mxu0 %v357
        %v463 = vpop.f32.mrb[0].mxu0
        %v464 = vadd.f32 0.0, %v463
        %v465 = vpop.f32.mrb[0].mxu0
        %466 = vmatprep.mubr.f32.mxu0 0.0
        %467 = vmatmul.mubr.f32.gmra.mrb[0].mxu0 %v358
        %v468 = vpop.f32.mrb[0].mxu0
        %v469 = vadd.f32 0.0, %v468
        %v470 = vpop.f32.mrb[0].mxu0
        %471 = vmatprep.mubr.f32.mxu0 0.0
        %472 = vmatmul.mubr.f32.gmra.mrb[0].mxu0 %v359
        %v473 = vpop.f32.mrb[0].mxu0
        %v474 = vadd.f32 0.0, %v473
        %v475 = vpop.f32.mrb[0].mxu0
        %476 = vmatprep.mubr.f32.mxu0 0.0
        %477 = vmatmul.mubr.f32.gmra.mrb[0].mxu0 %v360
        %v478 = vpop.f32.mrb[0].mxu0
        %v479 = vadd.f32 0.0, %v478
        %v480 = vpop.f32.mrb[0].mxu0
        %481 = vmatprep.mubr.f32.mxu0 0.0
        %482 = vmatmul.mubr.f32.gmra.mrb[0].mxu0 %v361
        %v483 = vpop.f32.mrb[0].mxu0
        %v484 = vadd.f32 0.0, %v483
        %v485 = vpop.f32.mrb[0].mxu0
        %486 = vmatprep.mubr.f32.mxu0 0.0
        %487 = vmatmul.mubr.f32.gmra.mrb[0].mxu0 %v362
        %v488 = vpop.f32.mrb[0].mxu0
        %v489 = vadd.f32 0.0, %v488
        %v490 = vpop.f32.mrb[0].mxu0
        %491 = vmatprep.mubr.f32.mxu0 0.0
        %492 = vmatmul.mubr.f32.gmra.mrb[0].mxu0 %v363
        %v493 = vpop.f32.mrb[0].mxu0
        %v494 = vadd.f32 0.0, %v493
        %v495 = vpop.f32.mrb[0].mxu0
        %496 = vmatprep.mubr.f32.mxu0 0.0
        %497 = vmatmul.mubr.f32.gmra.mrb[0].mxu0 %v364
        %v498 = vpop.f32.mrb[0].mxu0
        %v499 = vadd.f32 0.0, %v498
        %v500 = vpop.f32.mrb[0].mxu0
        %501 = vdwg.mxu0
        %v502 = vadd.f32 %v349, %v464
        %v503 = vadd.f32 %v350, %v469
        %v504 = vadd.f32 %v351, %v474
        %v505 = vadd.f32 %v352, %v479
        %v506 = vadd.f32 %v353, %v484
        %v507 = vadd.f32 %v354, %v489
        %v508 = vadd.f32 %v355, %v494
        %v509 = vadd.f32 %v356, %v499
        %vm510 = vcmask 64512
        %511 = vst.msk [vmem:[#allocation2] sm:$0xff] %vm510, %v502
        %512 = vst.msk [vmem:[#allocation2 + $0x8] sm:$0xff] %vm510, %v503
        %513 = vst.msk [vmem:[#allocation2 + $0x10] sm:$0xff] %vm510, %v504
        %514 = vst.msk [vmem:[#allocation2 + $0x18] sm:$0xff] %vm510, %v505
        %515 = vst.msk [vmem:[#allocation2 + $0x20] sm:$0xff] %vm510, %v506
        %516 = vst.msk [vmem:[#allocation2 + $0x28] sm:$0xff] %vm510, %v507
        %517 = vst.msk [vmem:[#allocation2 + $0x30] sm:$0xff] %vm510, %v508
        %518 = vst.msk [vmem:[#allocation2 + $0x38] sm:$0xff] %vm510, %v509
        %p519 = scmp.eq.s32.totalorder %s21, 1
        // Predicated region
        $region83: #{tpu_custom_call.1} parent=73 // pred_check
          %p520 = pneg %p519
        $region84: #{tpu_custom_call.1} parent=73 // pred_check_branch
          %522 = sbr.rel (%p520) target = $region86
        $region85: #{tpu_custom_call.1} parent=73 // pred_region
          %v523 = vld [vmem:[#allocation2] sm:$0xff]
          %v524 = vld [vmem:[#allocation2 + $0x8] sm:$0xff]
          %v525 = vld [vmem:[#allocation2 + $0x10] sm:$0xff]
          %v526 = vld [vmem:[#allocation2 + $0x18] sm:$0xff]
          %v527 = vld [vmem:[#allocation2 + $0x20] sm:$0xff]
          %v528 = vld [vmem:[#allocation2 + $0x28] sm:$0xff]
          %v529 = vld [vmem:[#allocation2 + $0x30] sm:$0xff]
          %v530 = vld [vmem:[#allocation2 + $0x38] sm:$0xff]
          %v531 = vpack.c.bf16 %v524, %v523
          %v532 = vpack.c.bf16 %v526, %v525
          %v533 = vpack.c.bf16 %v528, %v527
          %v534 = vpack.c.bf16 %v530, %v529
          %v535 = vld [vmem:[%s2] sm:$0xf]
          %v536 = vld [vmem:[%s3] sm:$0x1]
          %v538 = vlaneseq
          %v539 = vshrl.u32 %v538, 7
          %v540 = vsub.s32 0, %v539
          %v541 = vrot.slane %v536, %v540
          %v544 = vsel %vm510, %v531, 0
          %v547 = vsel %vm510, %v532, 0
          %v550 = vsel %vm510, %v533, 0
          %v553 = vsel %vm510, %v534, 0
          %vm555 = vcmask 1043456
          %v557 = vsel %vm555, %v535, 0
          %559 = vmatprep.subr.bf16.mxu0 0
          %560 = vmatpush1.bf16.msra.mxu0 %v557
          %561 = vmatprep.subr.bf16.mxu0 0
          %562 = vmatpush1.bf16.msra.mxu0 0
          %563 = vmatprep.subr.bf16.mxu0 0
          %564 = vmatpush1.bf16.msra.mxu0 0
          %565 = vmatprep.subr.bf16.mxu0 0
          %566 = vmatpush1.bf16.msra.mxu0 0
          %567 = vmatprep.subr.bf16.mxu0 0
          %568 = vmatpush1.bf16.msra.mxu0 0
          %569 = vmatprep.subr.bf16.mxu0 0
          %570 = vmatpush1.bf16.msra.mxu0 0
          %571 = vmatprep.subr.bf16.mxu0 0
          %572 = vmatpush1.bf16.msra.mxu0 0
          %573 = vmatprep.subr.bf16.mxu0 0
          %574 = vmatpush1.bf16.msra.mxu0 0
          %575 = vmatprep.subr.bf16.mxu0 0
          %576 = vmatpush1.bf16.msra.mxu0 0
          %577 = vmatprep.subr.bf16.mxu0 0
          %578 = vmatpush1.bf16.msra.mxu0 0
          %579 = vmatprep.subr.bf16.mxu0 0
          %580 = vmatpush1.bf16.msra.mxu0 0
          %581 = vmatprep.subr.bf16.mxu0 0
          %582 = vmatpush1.bf16.msra.mxu0 0
          %583 = vmatprep.subr.bf16.mxu0 0
          %584 = vmatpush1.bf16.msra.mxu0 0
          %585 = vmatprep.subr.bf16.mxu0 0
          %586 = vmatpush1.bf16.msra.mxu0 0
          %587 = vmatprep.subr.bf16.mxu0 0
          %588 = vmatpush1.bf16.msra.mxu0 0
          %589 = vmatprep.subr.bf16.mxu0 0
          %590 = vmatpush1.bf16.msra.mxu0 0
          %591 = vmatprep.mubr.bf16.mxu0 0
          %592 = vmatmul.mubr.bf16.gmra.mrb[0].mxu0 %v544
          %v593 = vpop.f32.mrb[0].mxu0
          %v594 = vadd.f32 %v541, %v593
          %v595 = vpop.f32.mrb[0].mxu0
          %v596 = vpop.f32.mrb[0].mxu0
          %v597 = vadd.f32 %v541, %v596
          %v598 = vpop.f32.mrb[0].mxu0
          %599 = vmatprep.mubr.bf16.mxu0 0
          %600 = vmatmul.mubr.bf16.gmra.mrb[0].mxu0 %v547
          %v601 = vpop.f32.mrb[0].mxu0
          %v602 = vadd.f32 %v541, %v601
          %v603 = vpop.f32.mrb[0].mxu0
          %v604 = vpop.f32.mrb[0].mxu0
          %v605 = vadd.f32 %v541, %v604
          %v606 = vpop.f32.mrb[0].mxu0
          %607 = vmatprep.mubr.bf16.mxu0 0
          %608 = vmatmul.mubr.bf16.gmra.mrb[0].mxu0 %v550
          %v609 = vpop.f32.mrb[0].mxu0
          %v610 = vadd.f32 %v541, %v609
          %v611 = vpop.f32.mrb[0].mxu0
          %v612 = vpop.f32.mrb[0].mxu0
          %v613 = vadd.f32 %v541, %v612
          %v614 = vpop.f32.mrb[0].mxu0
          %615 = vmatprep.mubr.bf16.mxu0 0
          %616 = vmatmul.mubr.bf16.gmra.mrb[0].mxu0 %v553
          %v617 = vpop.f32.mrb[0].mxu0
          %v618 = vadd.f32 %v541, %v617
          %v619 = vpop.f32.mrb[0].mxu0
          %v620 = vpop.f32.mrb[0].mxu0
          %v621 = vadd.f32 %v541, %v620
          %v622 = vpop.f32.mrb[0].mxu0
          %623 = vdwg.mxu0
          %v624 = vmax.f32 %v594, 0.0
          %v625 = vmax.f32 %v597, 0.0
          %v626 = vmax.f32 %v602, 0.0
          %v627 = vmax.f32 %v605, 0.0
          %v628 = vmax.f32 %v610, 0.0
          %v629 = vmax.f32 %v613, 0.0
          %v630 = vmax.f32 %v618, 0.0
          %v631 = vmax.f32 %v621, 0.0
          %v632 = vld [vmem:[%s4] sm:$0xff]
          %v633 = vld [vmem:[%s4 + $0x8] sm:$0xff]
          %v634 = vld [vmem:[%s4 + $0x10] sm:$0xff]
          %v635 = vld [vmem:[%s4 + $0x18] sm:$0xff]
          %v636 = vld [vmem:[%s4 + $0x20] sm:$0xff]
          %v637 = vld [vmem:[%s4 + $0x28] sm:$0xff]
          %v638 = vld [vmem:[%s4 + $0x30] sm:$0xff]
          %v639 = vld [vmem:[%s4 + $0x38] sm:$0xff]
          %v640 = vmul.f32 %v624, %v632
          %v641 = vmul.f32 %v625, %v633
          %v642 = vmul.f32 %v626, %v634
          %v643 = vmul.f32 %v627, %v635
          %v644 = vmul.f32 %v628, %v636
          %v645 = vmul.f32 %v629, %v637
          %v646 = vmul.f32 %v630, %v638
          %v647 = vmul.f32 %v631, %v639
          %648 = vst.msk [vmem:[%s334] sm:$0xff] %vm510, %v640
          %649 = vst.msk [vmem:[%s334 + $0x8] sm:$0xff] %vm510, %v641
          %650 = vst.msk [vmem:[%s334 + $0x10] sm:$0xff] %vm510, %v642
          %651 = vst.msk [vmem:[%s334 + $0x18] sm:$0xff] %vm510, %v643
          %652 = vst.msk [vmem:[%s334 + $0x20] sm:$0xff] %vm510, %v644
          %653 = vst.msk [vmem:[%s334 + $0x28] sm:$0xff] %vm510, %v645
          %654 = vst.msk [vmem:[%s334 + $0x30] sm:$0xff] %vm510, %v646
          %655 = vst.msk [vmem:[%s334 + $0x38] sm:$0xff] %vm510, %v647
        $region86: #{tpu_custom_call.1} parent=73 // pred_fallthru
          _
        %p656 = scmp.lt.s32.totalorder %s20, 1
        %s657 = scalar_select %p656, %s20, 1
        %s658 = smul.addr %s657, 8
        %s659 = smul.addr %s658, 8
        %s660 = scalar_lea.vmem %s5, %s659
        // Predicated region
        $region87: #{tpu_custom_call.1} parent=73 // pred_check
          %p661 = pneg %p163
        $region88: #{tpu_custom_call.1} parent=73 // pred_check_branch
          %663 = sbr.rel (%p661) target = $region90
        $region89: #{tpu_custom_call.1} parent=73 // pred_region
          _
        $region90: #{tpu_custom_call.1} parent=73 // pred_fallthru
          _
      $region74: #{tpu_custom_call.1} parent=5 // pred_fallthru
        _
      %p664 = scmp.le.s32.totalorder 2, %s11
      // Predicated region
      $region91: #{tpu_custom_call.1} parent=5 // pred_check
        %p665 = pneg %p664
      $region92: #{tpu_custom_call.1} parent=5 // pred_check_branch
        %667 = sbr.rel (%p665) target = $region94
      $region93: #{tpu_custom_call.1} parent=5 // pred_region
        %s668 = ssub.s32 %s11, 2
        // Predicated region
        $region95: #{tpu_custom_call.1} parent=93 // pred_check
          %p669 = pneg %p169
        $region96: #{tpu_custom_call.1} parent=93 // pred_check_branch
          %671 = sbr.rel (%p669) target = $region98
        $region97: #{tpu_custom_call.1} parent=93 // pred_region
          %p672 = scmp.lt.s32.totalorder %s22, 1
          %s673 = scalar_select %p672, %s22, 1
          %s674 = smul.addr %s673, 8
          %s675 = smul.addr %s674, 8
          %s676 = scalar_lea.vmem %s5, %s675
        $region98: #{tpu_custom_call.1} parent=93 // pred_fallthru
          _
      $region94: #{tpu_custom_call.1} parent=5 // pred_fallthru
        _
    $region6: #{tpu_custom_call.1} parent=1 // loop_footer
      %s15 = sadd.s32 1, %s11
    $region7: #{tpu_custom_call.1} parent=1 // loop_footer_branch
      %10 = sbr.rel target = $region3
    $region8: #{tpu_custom_call.1} parent=1 // loop_exit
      _

</llo_original>
